<compile_context>
chip_gen: v5e
topology: v5e:2x2
jax: 0.10.0
libtpu: 0.0.40
codegen_flags: <defaults>
</compile_context>

<pallas_src>
import functools

import jax
import jax.numpy as jnp
from jax.experimental import pallas as pl
from jax.experimental.pallas import tpu as pltpu


def _round_up(x, m):
    return (x + m - 1) // m * m


def _ce_kernel(logits_ref, target_ref, weights_ref, loss_ref,
               m_sc, l_sc, sel_sc, *maybe_sx,
               num_classes, label_smoothing, mask_tail):
    kc = pl.program_id(1)
    sx_sc = maybe_sx[0] if maybe_sx else None

    @pl.when(kc == 0)
    def _init():
        m_sc[...] = jnp.full_like(m_sc, -jnp.inf)
        l_sc[...] = jnp.zeros_like(l_sc)
        sel_sc[...] = jnp.zeros_like(sel_sc)
        if sx_sc is not None:
            sx_sc[...] = jnp.zeros_like(sx_sc)

    x = logits_ref[...].astype(jnp.float32)                    # (tb, tc)
    tb, tc = x.shape
    base = kc * tc                                             # chunk class offset (scalar)
    lane = jax.lax.broadcasted_iota(jnp.int32, (tb, tc), 1)    # LOCAL class ids

    # --- online logsumexp over class chunks.  The class tail is pre-padded
    #     with finfo.min in the wrapper, so no validity masking is needed:
    #     max() ignores the tail and exp(tail - m) underflows to 0. ---
    blk_max = jnp.max(x, axis=1, keepdims=True)
    m_new = jnp.maximum(m_sc[...], blk_max)
    alpha = jnp.exp(m_sc[...] - m_new)
    p = jnp.exp(x - m_new)
    l_sc[...] = alpha * l_sc[...] + jnp.sum(p, axis=1, keepdims=True)
    m_sc[...] = m_new

    # --- selected logit (class_select): compare the LOCAL iota against
    #     (target - base); targets are < num_classes so the padded tail can
    #     never be selected. ---
    t_local = target_ref[...] - base                           # (tb, 1) int32
    sel_sc[...] = sel_sc[...] + jnp.sum(
        jnp.where(lane == t_local, x, 0.0), axis=1, keepdims=True)

    # --- running sum(x) only when the smoothing term is used; tail masking
    #     only when the class axis was actually padded (both trace-time). ---
    if sx_sc is not None:
        xs = jnp.where(lane < (num_classes - base), x, 0.0) if mask_tail else x
        sx_sc[...] = sx_sc[...] + jnp.sum(xs, axis=1, keepdims=True)

    @pl.when(kc == pl.num_programs(1) - 1)
    def _finalize():
        lse = m_sc[...] + jnp.log(l_sc[...])                   # (tb, 1)
        loss = lse - (1.0 - label_smoothing) * sel_sc[...]
        if sx_sc is not None:
            loss = loss - label_smoothing * (sx_sc[...] * (1.0 / num_classes))
        loss = loss * weights_ref[...]                         # (tb, 1)
        # Lane-dense, unmasked store: broadcast across the 128 lanes and let
        # the wrapper slice lane 0 (replaces the old O(tb^2) col->row diag).
        loss_ref[...] = jnp.broadcast_to(loss, loss_ref.shape)


def cross_entropy_loss_pallas(logits, target, weights=None, *,
                              aggregate='mean', label_smoothing=0.0,
                              block_batch=512, block_classes=4096):
    """Pallas equivalent of CrossEntropyLoss.forward(input, target, weights)."""
    assert logits.ndim == 2
    assert aggregate in ('sum', 'mean', None)
    if not jnp.issubdtype(logits.dtype, jnp.floating):
        logits = logits.astype(jnp.float32)
    B, C = logits.shape

    # target may come in as (B,) or (B, 1); squeeze like the torch code.
    if target.ndim == 2:
        target = target[:, 0]
    assert target.ndim == 1 and target.shape[0] == B
    target2d = target.astype(jnp.int32).reshape(B, 1)

    if weights is None:
        weights2d = jnp.ones((B, 1), dtype=jnp.float32)
    else:
        assert weights.shape == (B,)
        weights2d = weights.astype(jnp.float32).reshape(B, 1)

    itemsize = jnp.dtype(logits.dtype).itemsize
    sub = {4: 8, 2: 16, 1: 32}.get(itemsize, 8)   # packed sublane multiple

    # Row tile: as large as requested, but aim for >= 2 batch blocks so the
    # "parallel" batch axis can shard across both v7x TensorCores.
    tb = min(_round_up(block_batch, sub),
             max(sub, _round_up(pl.cdiv(B, 2), sub)))
    tc = min(_round_up(block_classes, 128), _round_up(C, 128))
    b_pad = _round_up(B, tb)
    c_pad = _round_up(C, tc)

    # Pad the class tail with a huge negative (mask-via-padding); pad the
    # batch tail with zeros so padded rows stay finite (no NaN in the online
    # softmax); padded rows are sliced off before aggregation.
    if c_pad != C:
        neg_fill = float(jnp.finfo(logits.dtype).min)
        logits = jnp.pad(logits, ((0, 0), (0, c_pad - C)),
                         constant_values=neg_fill)
    if b_pad != B:
        logits = jnp.pad(logits, ((0, b_pad - B), (0, 0)))
        target2d = jnp.pad(target2d, ((0, b_pad - B), (0, 0)))
        weights2d = jnp.pad(weights2d, ((0, b_pad - B), (0, 0)))

    gb, gc = b_pad // tb, c_pad // tc

    use_smoothing = float(label_smoothing) != 0.0
    mask_tail = use_smoothing and (c_pad != C)
    n_scratch = 4 if use_smoothing else 3

    # VMEM budget: double-buffered logits tile + double-buffered lane-padded
    # target/weights/output blocks + lane-padded (tb,128) scratches + temps.
    vmem_needed = (2 * tb * tc * itemsize
                   + (2 * 2 + 2 + n_scratch) * tb * 128 * 4
                   + (4 << 20))
    vmem_limit = int(min(max(vmem_needed, 32 << 20), 48 << 20))  # safe on 64 MiB v7x

    scratch_shapes = [pltpu.VMEM((tb, 1), jnp.float32)] * n_scratch

    kernel = functools.partial(_ce_kernel, num_classes=C,
                               label_smoothing=float(label_smoothing),
                               mask_tail=mask_tail)

    out = pl.pallas_call(
        kernel,
        out_shape=jax.ShapeDtypeStruct((b_pad, 128), jnp.float32),
        grid_spec=pltpu.PrefetchScalarGridSpec(
            num_scalar_prefetch=0,
            grid=(gb, gc),                                    # reduction (class) axis last
            in_specs=[
                pl.BlockSpec((tb, tc), lambda i, k: (i, k)),  # logits
                pl.BlockSpec((tb, 1), lambda i, k: (i, 0)),   # target
                pl.BlockSpec((tb, 1), lambda i, k: (i, 0)),   # weights
            ],
            out_specs=pl.BlockSpec((tb, 128), lambda i, k: (i, 0)),
            scratch_shapes=scratch_shapes,
        ),
        compiler_params=pltpu.CompilerParams(
            dimension_semantics=("parallel", "arbitrary"),
            vmem_limit_bytes=vmem_limit),
    )(logits, target2d, weights2d)

    ce = out[:B, 0]   # drop batch padding and the broadcast lanes

    if aggregate == 'sum':
        return jnp.sum(ce)
    elif aggregate == 'mean':
        # NOTE: unweighted mean of weighted losses -- matches the torch module
        # above (NOT torch.nn.CrossEntropyLoss's weighted-mean convention).
        return jnp.mean(ce)
    return ce


def _reference(logits, target, weights=None, *, aggregate='mean', label_smoothing=0.0):
    """Pure-JAX reference mirroring the torch code (math in f32)."""
    logits = logits.astype(jnp.float32)
    lse = jax.scipy.special.logsumexp(logits, axis=1)
    sel = jnp.take_along_axis(logits, target.reshape(-1, 1).astype(jnp.int32), axis=1)[:, 0]
    loss = lse - (1 - label_smoothing) * sel - label_smoothing * jnp.mean(logits, axis=1)
    if weights is not None:
        loss = loss * weights.astype(jnp.float32)
    if aggregate == 'sum':
        return jnp.sum(loss)
    if aggregate == 'mean':
        return jnp.mean(loss)
    return loss


if __name__ == "__main__":
    key = jax.random.PRNGKey(0)
    k1, k2, k3, k4, k5 = jax.random.split(key, 5)

    # Case 1: module-default-style usage; exercises gb>=2 (megacore split).
    B, C = 16, 128
    logits = jax.random.normal(k1, (B, C), dtype=jnp.float32)
    target = jax.random.randint(k2, (B,), 0, C, dtype=jnp.int32)
    weights = jax.random.uniform(k3, (B,), dtype=jnp.float32)

    out_mean = cross_entropy_loss_pallas(
        logits, target, weights, aggregate='mean', label_smoothing=0.1)
    out_vec = cross_entropy_loss_pallas(
        logits, target, None, aggregate=None, label_smoothing=0.0)
    jax.block_until_ready((out_mean, out_vec))

    ref_mean = _reference(logits, target, weights, aggregate='mean', label_smoothing=0.1)
    ref_vec = _reference(logits, target, None, aggregate=None, label_smoothing=0.0)
    assert jnp.allclose(out_mean, ref_mean, atol=1e-5, rtol=1e-5)
    assert jnp.allclose(out_vec, ref_vec, atol=1e-5, rtol=1e-5)

    # Case 2: ragged B/C -> exercises -inf-style class-tail padding, batch
    # zero-padding, the 2-D grid, the smoothing tail mask and the online
    # logsumexp across class chunks.
    B2, C2 = 24, 200
    logits2 = jax.random.normal(k4, (B2, C2), dtype=jnp.float32)
    target2 = jax.random.randint(k5, (B2,), 0, C2, dtype=jnp.int32)
    out2 = cross_entropy_loss_pallas(
        logits2, target2, None, aggregate=None, label_smoothing=0.05,
        block_batch=16, block_classes=128)
    jax.block_until_ready(out2)
    ref2 = _reference(logits2, target2, None, aggregate=None, label_smoothing=0.05)
    assert jnp.allclose(out2, ref2, atol=1e-4, rtol=1e-4)

    # Case 3: bf16 logits (half the HBM traffic, the big win on v5e),
    # 'sum' aggregation, no smoothing scratch allocated.
    logits3 = logits.astype(jnp.bfloat16)
    out3 = cross_entropy_loss_pallas(
        logits3, target, weights, aggregate='sum', label_smoothing=0.0,
        block_classes=128)
    jax.block_until_ready(out3)
    ref3 = _reference(logits3, target, weights, aggregate='sum', label_smoothing=0.0)
    assert jnp.allclose(out3, ref3, atol=1e-3, rtol=1e-3)

    print("KERNEL_OK")
</pallas_src>

<mosaic_0001>
module attributes {stable_mosaic.version = 11 : i64} {
  func.func @_ce_kernel(%arg0: i32, %arg1: i32, %arg2: memref<8x128xf32, #tpu.memory_space<vmem>>, %arg3: memref<8x1xi32, #tpu.memory_space<vmem>>, %arg4: memref<8x1xf32, #tpu.memory_space<vmem>>, %arg5: memref<8x128xf32, #tpu.memory_space<vmem>>, %arg6: memref<8x1xf32, #tpu.memory_space<vmem>>, %arg7: memref<8x1xf32, #tpu.memory_space<vmem>>, %arg8: memref<8x1xf32, #tpu.memory_space<vmem>>, %arg9: memref<8x1xf32, #tpu.memory_space<vmem>>) attributes {dimension_semantics = [#tpu.dimension_semantics<parallel>, #tpu.dimension_semantics<arbitrary>], iteration_bounds = array<i64: 2, 1>, scalar_prefetch = 0 : i64, scratch_operands = 4 : i64, tpu.core_type = #tpu.core_type<tc>, window_params = [{transform_indices = @transform_0, window_bounds = array<i64: 8, 128>}, {transform_indices = @transform_1, window_bounds = array<i64: 8, 1>}, {transform_indices = @transform_2, window_bounds = array<i64: 8, 1>}, {transform_indices = @transform_3, window_bounds = array<i64: 8, 128>}]} {
    %c0_i32 = arith.constant 0 : i32
    %0 = arith.cmpi eq, %arg1, %c0_i32 : i32
    %1 = arith.extui %0 : i1 to i32
    %c0_i32_0 = arith.constant 0 : i32
    %2 = arith.cmpi ne, %1, %c0_i32_0 : i32
    scf.if %2 {
      %cst_28 = arith.constant 0xFF800000 : f32
      %43 = vector.broadcast %cst_28 : f32 to vector<8x1xf32>
      %c0_29 = arith.constant 0 : index
      %c0_30 = arith.constant 0 : index
      %44 = vector.load %arg6[%c0_29, %c0_30] : memref<8x1xf32, #tpu.memory_space<vmem>>, vector<8x1xf32>
      tpu.vector_store %arg6[%c0_29, %c0_30], %43 {strides = array<i32>} : memref<8x1xf32, #tpu.memory_space<vmem>>, vector<8x1xf32>,
      %cst_31 = arith.constant 0.000000e+00 : f32
      %45 = vector.broadcast %cst_31 : f32 to vector<8x1xf32>
      %c0_32 = arith.constant 0 : index
      %c0_33 = arith.constant 0 : index
      %46 = vector.load %arg7[%c0_32, %c0_33] : memref<8x1xf32, #tpu.memory_space<vmem>>, vector<8x1xf32>
      tpu.vector_store %arg7[%c0_32, %c0_33], %45 {strides = array<i32>} : memref<8x1xf32, #tpu.memory_space<vmem>>, vector<8x1xf32>,
      %cst_34 = arith.constant 0.000000e+00 : f32
      %47 = vector.broadcast %cst_34 : f32 to vector<8x1xf32>
      %c0_35 = arith.constant 0 : index
      %c0_36 = arith.constant 0 : index
      %48 = vector.load %arg8[%c0_35, %c0_36] : memref<8x1xf32, #tpu.memory_space<vmem>>, vector<8x1xf32>
      tpu.vector_store %arg8[%c0_35, %c0_36], %47 {strides = array<i32>} : memref<8x1xf32, #tpu.memory_space<vmem>>, vector<8x1xf32>,
      %cst_37 = arith.constant 0.000000e+00 : f32
      %49 = vector.broadcast %cst_37 : f32 to vector<8x1xf32>
      %c0_38 = arith.constant 0 : index
      %c0_39 = arith.constant 0 : index
      %50 = vector.load %arg9[%c0_38, %c0_39] : memref<8x1xf32, #tpu.memory_space<vmem>>, vector<8x1xf32>
      tpu.vector_store %arg9[%c0_38, %c0_39], %49 {strides = array<i32>} : memref<8x1xf32, #tpu.memory_space<vmem>>, vector<8x1xf32>,
    } else {
    }
    %c0 = arith.constant 0 : index
    %c0_1 = arith.constant 0 : index
    %3 = vector.load %arg2[%c0, %c0_1] : memref<8x128xf32, #tpu.memory_space<vmem>>, vector<8x128xf32>
    %c128_i32 = arith.constant 128 : i32
    %4 = arith.muli %arg1, %c128_i32 : i32
    %5 = tpu.iota {dimensions = array<i32: 1>} : vector<8x128xi32>
    %cst = arith.constant dense<0xFF800000> : vector<8xf32>
    %6 = vector.multi_reduction <maximumf>, %3, %cst [1] : vector<8x128xf32> to vector<8xf32>
    %7 = vector.shape_cast %6 : vector<8xf32> to vector<8x1xf32>
    %c0_2 = arith.constant 0 : index
    %c0_3 = arith.constant 0 : index
    %8 = vector.load %arg6[%c0_2, %c0_3] : memref<8x1xf32, #tpu.memory_space<vmem>>, vector<8x1xf32>
    %9 = arith.maximumf %8, %7 : vector<8x1xf32>
    %c0_4 = arith.constant 0 : index
    %c0_5 = arith.constant 0 : index
    %10 = vector.load %arg6[%c0_4, %c0_5] : memref<8x1xf32, #tpu.memory_space<vmem>>, vector<8x1xf32>
    %11 = arith.subf %10, %9 : vector<8x1xf32>
    %12 = math.exp %11 : vector<8x1xf32>
    %13 = vector.broadcast %9 : vector<8x1xf32> to vector<8x128xf32>
    %14 = arith.subf %3, %13 : vector<8x128xf32>
    %15 = math.exp %14 : vector<8x128xf32>
    %c0_6 = arith.constant 0 : index
    %c0_7 = arith.constant 0 : index
    %16 = vector.load %arg7[%c0_6, %c0_7] : memref<8x1xf32, #tpu.memory_space<vmem>>, vector<8x1xf32>
    %17 = arith.mulf %12, %16 : vector<8x1xf32>
    %cst_8 = arith.constant dense<0.000000e+00> : vector<8xf32>
    %18 = vector.multi_reduction <add>, %15, %cst_8 [1] : vector<8x128xf32> to vector<8xf32>
    %19 = vector.shape_cast %18 : vector<8xf32> to vector<8x1xf32>
    %20 = arith.addf %17, %19 : vector<8x1xf32>
    %c0_9 = arith.constant 0 : index
    %c0_10 = arith.constant 0 : index
    %21 = vector.load %arg7[%c0_9, %c0_10] : memref<8x1xf32, #tpu.memory_space<vmem>>, vector<8x1xf32>
    tpu.vector_store %arg7[%c0_9, %c0_10], %20 {strides = array<i32>} : memref<8x1xf32, #tpu.memory_space<vmem>>, vector<8x1xf32>,
    %c0_11 = arith.constant 0 : index
    %c0_12 = arith.constant 0 : index
    %22 = vector.load %arg6[%c0_11, %c0_12] : memref<8x1xf32, #tpu.memory_space<vmem>>, vector<8x1xf32>
    tpu.vector_store %arg6[%c0_11, %c0_12], %9 {strides = array<i32>} : memref<8x1xf32, #tpu.memory_space<vmem>>, vector<8x1xf32>,
    %c0_13 = arith.constant 0 : index
    %c0_14 = arith.constant 0 : index
    %23 = vector.load %arg3[%c0_13, %c0_14] : memref<8x1xi32, #tpu.memory_space<vmem>>, vector<8x1xi32>
    %24 = vector.broadcast %4 : i32 to vector<8x1xi32>
    %25 = arith.subi %23, %24 : vector<8x1xi32>
    %c0_15 = arith.constant 0 : index
    %c0_16 = arith.constant 0 : index
    %26 = vector.load %arg8[%c0_15, %c0_16] : memref<8x1xf32, #tpu.memory_space<vmem>>, vector<8x1xf32>
    %27 = vector.broadcast %25 : vector<8x1xi32> to vector<8x128xi32>
    %28 = arith.cmpi eq, %5, %27 : vector<8x128xi32>
    %cst_17 = arith.constant 0.000000e+00 : f32
    %29 = vector.broadcast %cst_17 : f32 to vector<8x128xf32>
    %30 = arith.select %28, %3, %29 : vector<8x128xi1>, vector<8x128xf32>
    %cst_18 = arith.constant dense<0.000000e+00> : vector<8xf32>
    %31 = vector.multi_reduction <add>, %30, %cst_18 [1] : vector<8x128xf32> to vector<8xf32>
    %32 = vector.shape_cast %31 : vector<8xf32> to vector<8x1xf32>
    %33 = arith.addf %26, %32 : vector<8x1xf32>
    %c0_19 = arith.constant 0 : index
    %c0_20 = arith.constant 0 : index
    %34 = vector.load %arg8[%c0_19, %c0_20] : memref<8x1xf32, #tpu.memory_space<vmem>>, vector<8x1xf32>
    tpu.vector_store %arg8[%c0_19, %c0_20], %33 {strides = array<i32>} : memref<8x1xf32, #tpu.memory_space<vmem>>, vector<8x1xf32>,
    %c0_21 = arith.constant 0 : index
    %c0_22 = arith.constant 0 : index
    %35 = vector.load %arg9[%c0_21, %c0_22] : memref<8x1xf32, #tpu.memory_space<vmem>>, vector<8x1xf32>
    %cst_23 = arith.constant dense<0.000000e+00> : vector<8xf32>
    %36 = vector.multi_reduction <add>, %3, %cst_23 [1] : vector<8x128xf32> to vector<8xf32>
    %37 = vector.shape_cast %36 : vector<8xf32> to vector<8x1xf32>
    %38 = arith.addf %35, %37 : vector<8x1xf32>
    %c0_24 = arith.constant 0 : index
    %c0_25 = arith.constant 0 : index
    %39 = vector.load %arg9[%c0_24, %c0_25] : memref<8x1xf32, #tpu.memory_space<vmem>>, vector<8x1xf32>
    tpu.vector_store %arg9[%c0_24, %c0_25], %38 {strides = array<i32>} : memref<8x1xf32, #tpu.memory_space<vmem>>, vector<8x1xf32>,
    %c0_i32_26 = arith.constant 0 : i32
    %40 = arith.cmpi eq, %arg1, %c0_i32_26 : i32
    %41 = arith.extui %40 : i1 to i32
    %c0_i32_27 = arith.constant 0 : i32
    %42 = arith.cmpi ne, %41, %c0_i32_27 : i32
    scf.if %42 {
      %c0_28 = arith.constant 0 : index
      %c0_29 = arith.constant 0 : index
      %43 = vector.load %arg6[%c0_28, %c0_29] : memref<8x1xf32, #tpu.memory_space<vmem>>, vector<8x1xf32>
      %c0_30 = arith.constant 0 : index
      %c0_31 = arith.constant 0 : index
      %44 = vector.load %arg7[%c0_30, %c0_31] : memref<8x1xf32, #tpu.memory_space<vmem>>, vector<8x1xf32>
      %45 = math.log %44 : vector<8x1xf32>
      %46 = arith.addf %43, %45 : vector<8x1xf32>
      %c0_32 = arith.constant 0 : index
      %c0_33 = arith.constant 0 : index
      %47 = vector.load %arg8[%c0_32, %c0_33] : memref<8x1xf32, #tpu.memory_space<vmem>>, vector<8x1xf32>
      %cst_34 = arith.constant 0.899999976 : f32
      %48 = vector.broadcast %cst_34 : f32 to vector<8x1xf32>
      %49 = arith.mulf %48, %47 : vector<8x1xf32>
      %50 = arith.subf %46, %49 : vector<8x1xf32>
      %c0_35 = arith.constant 0 : index
      %c0_36 = arith.constant 0 : index
      %51 = vector.load %arg9[%c0_35, %c0_36] : memref<8x1xf32, #tpu.memory_space<vmem>>, vector<8x1xf32>
      %cst_37 = arith.constant 7.812500e-03 : f32
      %52 = vector.broadcast %cst_37 : f32 to vector<8x1xf32>
      %53 = arith.mulf %51, %52 : vector<8x1xf32>
      %cst_38 = arith.constant 1.000000e-01 : f32
      %54 = vector.broadcast %cst_38 : f32 to vector<8x1xf32>
      %55 = arith.mulf %54, %53 : vector<8x1xf32>
      %56 = arith.subf %50, %55 : vector<8x1xf32>
      %c0_39 = arith.constant 0 : index
      %c0_40 = arith.constant 0 : index
      %57 = vector.load %arg4[%c0_39, %c0_40] : memref<8x1xf32, #tpu.memory_space<vmem>>, vector<8x1xf32>
      %58 = arith.mulf %56, %57 : vector<8x1xf32>
      %59 = vector.shape_cast %58 : vector<8x1xf32> to vector<8x1xf32>
      %60 = vector.broadcast %59 : vector<8x1xf32> to vector<8x128xf32>
      %c0_41 = arith.constant 0 : index
      %c0_42 = arith.constant 0 : index
      %61 = vector.load %arg5[%c0_41, %c0_42] : memref<8x128xf32, #tpu.memory_space<vmem>>, vector<8x128xf32>
      tpu.vector_store %arg5[%c0_41, %c0_42], %60 {strides = array<i32>} : memref<8x128xf32, #tpu.memory_space<vmem>>, vector<8x128xf32>,
    } else {
    }
    return
  }
  func.func @transform_0(%arg0: i32, %arg1: i32) -> (i32, i32) {
    %c0_i32 = arith.constant 0 : i32
    return %arg0, %arg1 : i32, i32
  }
  func.func @transform_1(%arg0: i32, %arg1: i32) -> (i32, i32) {
    %c0_i32 = arith.constant 0 : i32
    %c0_i32_0 = arith.constant 0 : i32
    return %arg0, %c0_i32 : i32, i32
  }
  func.func @transform_2(%arg0: i32, %arg1: i32) -> (i32, i32) {
    %c0_i32 = arith.constant 0 : i32
    %c0_i32_0 = arith.constant 0 : i32
    return %arg0, %c0_i32 : i32, i32
  }
  func.func @transform_3(%arg0: i32, %arg1: i32) -> (i32, i32) {
    %c0_i32 = arith.constant 0 : i32
    %c0_i32_0 = arith.constant 0 : i32
    return %arg0, %c0_i32 : i32, i32
  }
}

</mosaic_0001>

<llo_original>
// kernel: tpu_custom_call.1
$region0: #{tpu_custom_call.1}
  #allocation0 [shape = 'u32[]', space=smem, size = 0x4, offset = 0x4, fixed_abs, tag = 'smem constant byte address 0x4 - core index']
  #allocation1 [shape = 'u32[72,128]{1,0:T(1,128)}', space=vmem, size = 0x9000, scoped, tag = 'internal scratch']
  #allocation2 [shape = 'f32[8,1]{1,0:T(8,128)}', space=vmem, size = 0x1000, scoped, tag = 'scratch operand']
  #allocation3 [shape = 'f32[8,1]{1,0:T(8,128)}', space=vmem, size = 0x1000, scoped, tag = 'scratch operand']
  #allocation4 [shape = 'f32[8,1]{1,0:T(8,128)}', space=vmem, size = 0x1000, scoped, tag = 'scratch operand']
  #allocation5 [shape = 'f32[8,1]{1,0:T(8,128)}', space=vmem, size = 0x1000, scoped, tag = 'scratch operand']
  %s0 = inlined_call_operand.vmem [shape: f32[16,128], index: 0, kind: input, shape index: {}]
  %s1 = inlined_call_operand.vmem [shape: s32[16,1], index: 1, kind: input, shape index: {}]
  %s2 = inlined_call_operand.vmem [shape: f32[16,1], index: 2, kind: input, shape index: {}]
  %s3 = inlined_call_operand.hbm [shape: f32[16,128], index: 3, kind: output, shape index: {}]
  %s4 = sld [smem:[#allocation0]]
  $region53: #{tpu_custom_call.1} parent=0
    _
  %s6 = ssub.s32 1, %s4
  %s7 = scalar_select 0, %s6, %s4
  $region1: #{tpu_custom_call.1} parent=0
    #allocation6 [shape = 'u8[8192]{0}', space=vmem, size = 0x2000, scoped, tag = 'output window, operand 0']
    #allocation7 [shape = 's32[2]{0}', space=sflag, size = 0x8, scoped, tag = 'scoped memory for tpu_custom_call.1']
    %8 = vsyncpa [#allocation7], 0
    %s9 = scalar_lea.sflag [#allocation7], 1
    %10 = vsyncpa %s9, 0
    loop: start=0, step=1, limit=4
    $region2: #{tpu_custom_call.1} parent=1 // loop_pre_header
      _
    $region3: #{tpu_custom_call.1} parent=1 // loop_header
      %s12 = sphi 0, %s16
      %p13 = scmp.ge.s32.totalorder %s12, 4
      %s19 = sphi 0, %s31
      %s20 = sphi 0, %s27
      %s21 = sphi 0, %s19
      %s22 = sphi 0, %s20
      %s23 = sphi 0, %s21
      %s24 = sphi 0, %s22
      %s36 = sphi 0, %s38
      %s39 = sphi 0, %s36
      %s40 = sphi 0, %s39
      %s56 = sphi 0, %s40
      %s62 = sphi 0, %s64
      %s65 = sphi 0, %s62
      %s66 = sphi 0, %s65
      %s82 = sphi 0, %s66
      %s88 = sphi 0, %s90
      %s91 = sphi 0, %s88
      %s92 = sphi 0, %s91
      %s108 = sphi 0, %s92
      %s114 = sphi 0, %s116
      %s117 = sphi 0, %s114
      %s118 = sphi 0, %s117
      %s134 = sphi 0, %s118
    $region4: #{tpu_custom_call.1} parent=1 // loop_header_branch
      %15 = sbr.rel (%p13) target = $region8
    $region5: #{tpu_custom_call.1} parent=1 // loop_body
      %s17 = ssub.s32 %s12, 1
      %s18 = ssub.s32 %s12, 2
      %s25 = sadd.s32 1, %s20
      %p26 = scmp.ge.s32.totalorder %s25, 1
      %s27 = scalar_select %p26, 0, %s25
      %s28 = sadd.s32 1, %s19
      %s29 = scalar_select %p26, %s28, %s19
      %p30 = scmp.ge.s32.totalorder %s29, 2
      %s31 = scalar_select %p30, 0, %s29
      %s32 = ssub.s32 %s19, %s31
      %s33 = ssub.s32 %s20, %s27
      %s34 = sor.u32 %s32, %s33
      %p35 = scmp.eq.s32.totalorder %s34, 0
      %s37 = sadd.s32 %s36, 1
      %s38 = scalar_select %p35, %s36, %s37
      %p41 = pneg %p35
      %p42 = scmp.eq.s32.totalorder %s12, 1
      %p43 = por %p41, %p42
      %p44 = scmp.ne.s32.totalorder %s36, %s39
      %p45 = scmp.eq.s32.totalorder %s12, 0
      %p46 = por %p44, %p45
      %p47 = scmp.ne.s32.totalorder %s36, %s39
      %p48 = scmp.eq.s32.totalorder %s17, 1
      %p49 = por %p47, %p48
      %p50 = scmp.ne.s32.totalorder %s39, %s40
      %p51 = scmp.eq.s32.totalorder %s17, 0
      %p52 = por %p50, %p51
      %p53 = scmp.ne.s32.totalorder %s39, %s40
      %p54 = scmp.eq.s32.totalorder %s18, 1
      %p55 = por %p53, %p54
      %p57 = scmp.ne.s32.totalorder %s40, %s56
      %p58 = scmp.eq.s32.totalorder %s18, 0
      %p59 = por %p57, %p58
      %s60 = ssub.s32 %s19, %s31
      %p61 = scmp.eq.s32.totalorder %s60, 0
      %s63 = sadd.s32 %s62, 1
      %s64 = scalar_select %p61, %s62, %s63
      %p67 = pneg %p61
      %p68 = scmp.eq.s32.totalorder %s12, 1
      %p69 = por %p67, %p68
      %p70 = scmp.ne.s32.totalorder %s62, %s65
      %p71 = scmp.eq.s32.totalorder %s12, 0
      %p72 = por %p70, %p71
      %p73 = scmp.ne.s32.totalorder %s62, %s65
      %p74 = scmp.eq.s32.totalorder %s17, 1
      %p75 = por %p73, %p74
      %p76 = scmp.ne.s32.totalorder %s65, %s66
      %p77 = scmp.eq.s32.totalorder %s17, 0
      %p78 = por %p76, %p77
      %p79 = scmp.ne.s32.totalorder %s65, %s66
      %p80 = scmp.eq.s32.totalorder %s18, 1
      %p81 = por %p79, %p80
      %p83 = scmp.ne.s32.totalorder %s66, %s82
      %p84 = scmp.eq.s32.totalorder %s18, 0
      %p85 = por %p83, %p84
      %s86 = ssub.s32 %s19, %s31
      %p87 = scmp.eq.s32.totalorder %s86, 0
      %s89 = sadd.s32 %s88, 1
      %s90 = scalar_select %p87, %s88, %s89
      %p93 = pneg %p87
      %p94 = scmp.eq.s32.totalorder %s12, 1
      %p95 = por %p93, %p94
      %p96 = scmp.ne.s32.totalorder %s88, %s91
      %p97 = scmp.eq.s32.totalorder %s12, 0
      %p98 = por %p96, %p97
      %p99 = scmp.ne.s32.totalorder %s88, %s91
      %p100 = scmp.eq.s32.totalorder %s17, 1
      %p101 = por %p99, %p100
      %p102 = scmp.ne.s32.totalorder %s91, %s92
      %p103 = scmp.eq.s32.totalorder %s17, 0
      %p104 = por %p102, %p103
      %p105 = scmp.ne.s32.totalorder %s91, %s92
      %p106 = scmp.eq.s32.totalorder %s18, 1
      %p107 = por %p105, %p106
      %p109 = scmp.ne.s32.totalorder %s92, %s108
      %p110 = scmp.eq.s32.totalorder %s18, 0
      %p111 = por %p109, %p110
      %s112 = ssub.s32 %s19, %s31
      %p113 = scmp.eq.s32.totalorder %s112, 0
      %s115 = sadd.s32 %s114, 1
      %s116 = scalar_select %p113, %s114, %s115
      %p119 = pneg %p113
      %p120 = scmp.eq.s32.totalorder %s12, 1
      %p121 = por %p119, %p120
      %p122 = scmp.ne.s32.totalorder %s114, %s117
      %p123 = scmp.eq.s32.totalorder %s12, 0
      %p124 = por %p122, %p123
      %p125 = scmp.ne.s32.totalorder %s114, %s117
      %p126 = scmp.eq.s32.totalorder %s17, 1
      %p127 = por %p125, %p126
      %p128 = scmp.ne.s32.totalorder %s117, %s118
      %p129 = scmp.eq.s32.totalorder %s17, 0
      %p130 = por %p128, %p129
      %p131 = scmp.ne.s32.totalorder %s117, %s118
      %p132 = scmp.eq.s32.totalorder %s18, 1
      %p133 = por %p131, %p132
      %p135 = scmp.ne.s32.totalorder %s118, %s134
      %p136 = scmp.eq.s32.totalorder %s18, 0
      %p137 = por %p135, %p136
      %p138 = scmp.le.s32.totalorder 1, %s12
      %p139 = scmp.lt.s32.totalorder %s12, 3
      %p140 = pnand %p138, %p139
      %p141 = pneg %p140
      // Predicated region
      $region9: #{tpu_custom_call.1} parent=5 // pred_check
        _
      $region10: #{tpu_custom_call.1} parent=5 // pred_check_branch
        %143 = sbr.rel (%p140) target = $region12
      $region11: #{tpu_custom_call.1} parent=5 // pred_region
        %s144 = ssub.s32 %s12, 1
      $region12: #{tpu_custom_call.1} parent=5 // pred_fallthru
        _
      %p145 = scmp.lt.s32.totalorder %s12, 2
      // Predicated region
      $region13: #{tpu_custom_call.1} parent=5 // pred_check
        %p146 = pneg %p145
      $region14: #{tpu_custom_call.1} parent=5 // pred_check_branch
        %148 = sbr.rel (%p146) target = $region16
      $region15: #{tpu_custom_call.1} parent=5 // pred_region
        // Predicated region
        $region17: #{tpu_custom_call.1} parent=15 // pred_check
          %p149 = pneg %p46
        $region18: #{tpu_custom_call.1} parent=15 // pred_check_branch
          %151 = sbr.rel (%p149) target = $region20
        $region19: #{tpu_custom_call.1} parent=15 // pred_region
          %p152 = scmp.lt.s32.totalorder %s19, 1
          %s153 = scalar_select %p152, %s19, 1
          %p154 = scmp.lt.s32.totalorder %s20, 0
          %s155 = scalar_select %p154, %s20, 0
          %s156 = sadd.s32 %s155, %s153
          %s157 = smul.addr %s156, 8
          %s158 = scalar_lea.vmem %s0, %s157
        $region20: #{tpu_custom_call.1} parent=15 // pred_fallthru
          _
        // Predicated region
        $region21: #{tpu_custom_call.1} parent=15 // pred_check
          %p159 = pneg %p72
        $region22: #{tpu_custom_call.1} parent=15 // pred_check_branch
          %161 = sbr.rel (%p159) target = $region24
        $region23: #{tpu_custom_call.1} parent=15 // pred_region
          %p162 = scmp.lt.s32.totalorder %s19, 1
          %s163 = scalar_select %p162, %s19, 1
          %s164 = smul.addr %s163, 8
          %s165 = scalar_lea.vmem %s1, %s164
        $region24: #{tpu_custom_call.1} parent=15 // pred_fallthru
          _
        // Predicated region
        $region25: #{tpu_custom_call.1} parent=15 // pred_check
          %p166 = pneg %p98
        $region26: #{tpu_custom_call.1} parent=15 // pred_check_branch
          %168 = sbr.rel (%p166) target = $region28
        $region27: #{tpu_custom_call.1} parent=15 // pred_region
          %p169 = scmp.lt.s32.totalorder %s19, 1
          %s170 = scalar_select %p169, %s19, 1
          %s171 = smul.addr %s170, 8
          %s172 = scalar_lea.vmem %s2, %s171
        $region28: #{tpu_custom_call.1} parent=15 // pred_fallthru
          _
      $region16: #{tpu_custom_call.1} parent=5 // pred_fallthru
        _
      %p173 = scmp.le.s32.totalorder 1, %s12
      %p174 = scmp.lt.s32.totalorder %s12, 3
      %p175 = pnand %p173, %p174
      %p176 = pneg %p175
      // Predicated region
      $region29: #{tpu_custom_call.1} parent=5 // pred_check
        _
      $region30: #{tpu_custom_call.1} parent=5 // pred_check_branch
        %178 = sbr.rel (%p175) target = $region32
      $region31: #{tpu_custom_call.1} parent=5 // pred_region
        %s179 = ssub.s32 %s12, 1
        %p180 = scmp.lt.s32.totalorder %s21, 1
        %s181 = scalar_select %p180, %s21, 1
        %p182 = scmp.lt.s32.totalorder %s22, 0
        %s183 = scalar_select %p182, %s22, 0
        %s184 = sadd.s32 %s183, %s181
        %s185 = smul.addr %s184, 8
        %s186 = scalar_lea.vmem %s0, %s185
        %p187 = pneg %p52
        %p188 = pneg %p49
        %p189 = scmp.lt.s32.totalorder %s21, 1
        %s190 = scalar_select %p189, %s21, 1
        %s191 = smul.addr %s190, 8
        %s192 = scalar_lea.vmem %s1, %s191
        %p193 = pneg %p78
        %p194 = pneg %p75
        %p195 = scmp.lt.s32.totalorder %s21, 1
        %s196 = scalar_select %p195, %s21, 1
        %s197 = smul.addr %s196, 8
        %s198 = scalar_lea.vmem %s2, %s197
        %p199 = pneg %p104
        %p200 = pneg %p101
        %p201 = pneg %p130
        %p202 = pneg %p127
        %s203 = sand.u32 %s117, 1
        %s204 = scalar_lea.sflag [#allocation7], %s203
        %s205 = sand.u32 %s117, 1
        %s206 = smul.addr %s205, 8
        %s207 = scalar_lea.vmem [#allocation6], %s206
        %p208 = scmp.lt.s32.totalorder %s21, 1
        %s209 = scalar_select %p208, %s21, 1
        %p210 = scmp.lt.s32.totalorder %s22, 0
        %s211 = scalar_select %p210, %s22, 0
        %s212 = sadd.s32 %s211, %s209
        %s213 = smul.addr %s212, 8
        %s214 = scalar_lea.vmem %s0, %s213
        %p215 = scmp.lt.s32.totalorder %s21, 1
        %s216 = scalar_select %p215, %s21, 1
        %s217 = smul.addr %s216, 8
        %s218 = scalar_lea.vmem %s1, %s217
        %p219 = scmp.lt.s32.totalorder %s21, 1
        %s220 = scalar_select %p219, %s21, 1
        %s221 = smul.addr %s220, 8
        %s222 = scalar_lea.vmem %s2, %s221
        %p223 = scmp.eq.s32.totalorder %s22, 0
        // Predicated region
        $region33: #{tpu_custom_call.1} parent=31 // pred_check
          %p224 = pneg %p223
        $region34: #{tpu_custom_call.1} parent=31 // pred_check_branch
          %226 = sbr.rel (%p224) target = $region36
        $region35: #{tpu_custom_call.1} parent=31 // pred_region
          %vm227 = vcmask 7168
          %228 = vst.msk [vmem:[#allocation2] sm:$0xff] %vm227, -inf
          %229 = vst.msk [vmem:[#allocation3] sm:$0xff] %vm227, 0.0
          %230 = vst.msk [vmem:[#allocation4] sm:$0xff] %vm227, 0.0
          %231 = vst.msk [vmem:[#allocation5] sm:$0xff] %vm227, 0.0
        $region36: #{tpu_custom_call.1} parent=31 // pred_fallthru
          _
        %v232 = vld [vmem:[%s214] sm:$0xff]
        %s233 = smul.u32 %s22, 128
        %v234 = vlaneseq
        %v235 = vand.u32 %v234, 127
        %236 = vmax.xlane.f32.xlu0 %v232
        %v237 = vpop.xlane.xlu0 %236
        %v238 = vld [vmem:[#allocation2] sm:$0xff]
        %v239 = vmax.f32 %v238, %v237
        %v240 = vsub.f32 %v238, %v239
        %v241 = vmul.f32 %v240, 1.442695
        %v242 = vpow.pop %v241
        %244 = vset.pattern.permute.xlu0 0
        %245 = vperm.xlu0 %244, %v239
        %v246 = vpop.permute.xlu0 %245
        %v248 = vsub.f32 %v232, %v246
        %v249 = vmul.f32 %v248, 1.442695
        %v250 = vpow.pop %v249
        %v251 = vld [vmem:[#allocation3] sm:$0xff]
        %v252 = vmul.f32 %v242, %v251
        %253 = vadd.xlane.f32.xlu0 %v250
        %v254 = vpop.xlane.xlu0 %253
        %v255 = vadd.f32 %v252, %v254
        %vm256 = vcmask 7168
        %257 = vst.msk [vmem:[#allocation3] sm:$0xff] %vm256, %v255
        %258 = vst.msk [vmem:[#allocation2] sm:$0xff] %vm256, %v239
        %v259 = vld [vmem:[%s218] sm:$0xff]
        %v260 = vstv %s233
        %v261 = vsub.s32 %v259, %v260
        %v262 = vld [vmem:[#allocation4] sm:$0xff]
        %263 = vset.pattern.permute.xlu0 0
        %264 = vperm.xlu0 %263, %v261
        %v265 = vpop.permute.xlu0 %264
        %vm266 = vcmp.eq.s32.totalorder %v235, %v265
        %v267 = vsel %vm266, %v232, 0.0
        %268 = vadd.xlane.f32.xlu0 %v267
        %v269 = vpop.xlane.xlu0 %268
        %v270 = vadd.f32 %v262, %v269
        %271 = vst.msk [vmem:[#allocation4] sm:$0xff] %vm256, %v270
        %v272 = vld [vmem:[#allocation5] sm:$0xff]
        %273 = vadd.xlane.f32.xlu0 %v232
        %v274 = vpop.xlane.xlu0 %273
        %v275 = vadd.f32 %v272, %v274
        %276 = vst.msk [vmem:[#allocation5] sm:$0xff] %vm256, %v275
        // Predicated region
        $region37: #{tpu_custom_call.1} parent=31 // pred_check
          %p277 = pneg %p223
        $region38: #{tpu_custom_call.1} parent=31 // pred_check_branch
          %279 = sbr.rel (%p277) target = $region40
        $region39: #{tpu_custom_call.1} parent=31 // pred_region
          %v280 = vld [vmem:[#allocation2] sm:$0xff]
          %v281 = vld [vmem:[#allocation3] sm:$0xff]
          %v282 = vlog2.pop %v281
          %v283 = vmul.f32 %v282, 0.6931472
          %v284 = vadd.f32 %v280, %v283
          %v285 = vld [vmem:[#allocation4] sm:$0xff]
          %v286 = vmul.f32 %v285, 0.9
          %v287 = vsub.f32 %v284, %v286
          %v288 = vld [vmem:[#allocation5] sm:$0xff]
          %v289 = vmul.f32 %v288, 0.0078125
          %v290 = vmul.f32 %v289, 0.1
          %v291 = vsub.f32 %v287, %v290
          %v292 = vld [vmem:[%s222] sm:$0xff]
          %v293 = vmul.f32 %v291, %v292
          %295 = vset.pattern.permute.xlu0 0
          %296 = vperm.xlu0 %295, %v293
          %v297 = vpop.permute.xlu0 %296
          %299 = vst [vmem:[%s207] sm:$0xff] %v297
        $region40: #{tpu_custom_call.1} parent=31 // pred_fallthru
          _
        %s300 = sand.u32 %s117, 1
        %s301 = scalar_lea.sflag [#allocation7], %s300
        %s302 = sand.u32 %s117, 1
        %s303 = smul.addr %s302, 8
        %s304 = scalar_lea.vmem [#allocation6], %s303
        // Predicated region
        $region41: #{tpu_custom_call.1} parent=31 // pred_check
          %p305 = pneg %p127
        $region42: #{tpu_custom_call.1} parent=31 // pred_check_branch
          %307 = sbr.rel (%p305) target = $region44
        $region43: #{tpu_custom_call.1} parent=31 // pred_region
          %309 = vsyncadd %s301, 0
          %s310 = smul.addr %s21, 8
          %s311 = scalar_lea.hbm %s3, %s310
          %s313 = sshll.u32 %s304, 4
          %s314 = int_to_ptr.vmem [resolvable:$true] %s313
          %s315 = sshll.u32 %s311, 4
          %s316 = int_to_ptr.hbm [resolvable:$true] %s315
          %318 = dma.vmem_to_hbm [thread:$0]  %s314, 128, %s316, %s301
        $region44: #{tpu_custom_call.1} parent=31 // pred_fallthru
          _
      $region32: #{tpu_custom_call.1} parent=5 // pred_fallthru
        _
      %p319 = scmp.le.s32.totalorder 2, %s12
      // Predicated region
      $region45: #{tpu_custom_call.1} parent=5 // pred_check
        %p320 = pneg %p319
      $region46: #{tpu_custom_call.1} parent=5 // pred_check_branch
        %322 = sbr.rel (%p320) target = $region48
      $region47: #{tpu_custom_call.1} parent=5 // pred_region
        %s323 = ssub.s32 %s12, 2
        // Predicated region
        $region49: #{tpu_custom_call.1} parent=47 // pred_check
          %p324 = pneg %p133
        $region50: #{tpu_custom_call.1} parent=47 // pred_check_branch
          %326 = sbr.rel (%p324) target = $region52
        $region51: #{tpu_custom_call.1} parent=47 // pred_region
          %s327 = sand.u32 %s118, 1
          %s328 = scalar_lea.sflag [#allocation7], %s327
          %s329 = sand.u32 %s118, 1
          %s330 = smul.addr %s329, 8
          %s331 = scalar_lea.vmem [#allocation6], %s330
          %333 = dma.done %s328, 128
        $region52: #{tpu_custom_call.1} parent=47 // pred_fallthru
          _
      $region48: #{tpu_custom_call.1} parent=5 // pred_fallthru
        _
    $region6: #{tpu_custom_call.1} parent=1 // loop_footer
      %s16 = sadd.s32 1, %s12
    $region7: #{tpu_custom_call.1} parent=1 // loop_footer_branch
      %11 = sbr.rel target = $region3
    $region8: #{tpu_custom_call.1} parent=1 // loop_exit
      _
    %334 = vsyncpa [#allocation7], 1
    %s335 = scalar_lea.sflag [#allocation7], 1
    %336 = vsyncpa %s335, 1

</llo_original>
